<compile_context>
chip_gen: v6e
topology: v6e:2x2x1
jax: 0.10.0
libtpu: 0.0.40
codegen_flags: <defaults>
</compile_context>

<pallas_src>
import functools
from typing import List, Union

import jax
import jax.numpy as jnp
from jax.experimental import pallas as pl
from jax.experimental.pallas import tpu as pltpu


LANE = 128       # feature dims padded to the 128-lane vreg width (lane-dense I/O, full MXU tiles)
SUBLANE = 8      # batch (second-to-last dim) granularity
MAX_TB = 1024    # upper bound on batch-tile rows
MIB = 1024 * 1024


def _round_up(x: int, m: int) -> int:
    return ((x + m - 1) // m) * m


def _vmem_capacity_bytes() -> int:
    """Physical per-core VMEM; conservative v7x value (64 MiB) if the query fails."""
    try:
        return int(pltpu.get_tpu_info().vmem_capacity_bytes)
    except Exception:
        return 64 * MIB


def _vmem_budget_bytes() -> int:
    # Plan tiles against ~70% of physical VMEM; leave headroom for compiler temps.
    return int(_vmem_capacity_bytes() * 0.70)


def _vmem_limit_bytes(need: int) -> int:
    # Scoped-VMEM limit handed to Mosaic: needed bytes + 25% margin, clamped to
    # [32 MiB, 7/8 of physical].  The default (16/32 MiB) is far below physical.
    ceiling = max(32 * MIB, (_vmem_capacity_bytes() * 7) // 8)
    return int(min(max(need * 5 // 4, 32 * MIB), ceiling))


def _pick_tile(dim_pad: int) -> int:
    """Largest tile in {512, 256, 128} dividing a 128-padded feature dim."""
    for t in (512, 256, 128):
        if dim_pad % t == 0:
            return t
    return dim_pad


# --------------------------------------------------------------------------------------
# Kernels
# --------------------------------------------------------------------------------------
def _fused_mlp_kernel(x_ref, *refs, n_layers: int):
    """o = W_n @ relu(... relu(W_1 @ x + b_1) ...) + b_n with every layer fused.

    refs = (w_0, b_0, ..., w_{n-1}, b_{n-1}, o_ref).  Intermediate activations never
    leave the chip.  Matmuls are bf16 on the MXU with f32 accumulation; the bias/ReLU
    epilogue stays f32 on the VPU (v5e has no bf16 VPU path -- do not regress).
    """
    o_ref = refs[-1]
    act = x_ref[...].astype(jnp.bfloat16)    # f32 or bf16 input; cast is free vs. HBM
    acc = None
    for i in range(n_layers):
        w = refs[2 * i][...]                 # bf16 (Din_pad, Dout_pad)
        b = refs[2 * i + 1][...]             # f32  (1, Dout_pad)
        acc = jnp.dot(act, w, preferred_element_type=jnp.float32)
        acc = acc + b
        if i < n_layers - 1:
            acc = jnp.maximum(acc, 0.0)      # ReLU between linears, not after the last
            act = acc.astype(jnp.bfloat16)
    o_ref[...] = acc.astype(o_ref.dtype)


def _tiled_linear_kernel(x_ref, w_ref, b_ref, o_ref, acc_ref, *, apply_relu: bool):
    """One Linear (+ optional ReLU) with a K-reduction grid axis and f32 accumulator."""
    k = pl.program_id(2)

    @pl.when(k == 0)
    def _():
        acc_ref[...] = jnp.zeros_like(acc_ref)

    acc_ref[...] += jnp.dot(x_ref[...].astype(jnp.bfloat16), w_ref[...],
                            preferred_element_type=jnp.float32)

    @pl.when(k == pl.num_programs(2) - 1)
    def _():
        r = acc_ref[...] + b_ref[...]
        if apply_relu:
            r = jnp.maximum(r, 0.0)
        o_ref[...] = r.astype(o_ref.dtype)


# --------------------------------------------------------------------------------------
# Tiling plan / wrappers
# --------------------------------------------------------------------------------------
def _plan_fused_batch(B, in_pad, out_pad, max_pad, weight_bytes, out_isz, input_dim, budget):
    """Pick (tb, b_pad, direct_input) for the fused path, or None if weights don't fit."""
    b8 = _round_up(max(B, 1), SUBLANE)
    direct_possible = (input_dim % LANE == 0) and B > 0 and (B % SUBLANE == 0)
    in_isz = 4 if direct_possible else 2
    # Per batch-row VMEM: double-buffered x tile + double-buffered out tile + acc/act
    # temporaries of the widest layer.
    per_row = 2 * in_pad * in_isz + 2 * out_pad * out_isz + 2 * max_pad * 4
    avail = budget - weight_bytes
    if avail < per_row * SUBLANE:
        return None                           # weights too big for the resident design
    tb_budget = min(MAX_TB, (avail // per_row) // SUBLANE * SUBLANE)
    # Keep grid >= 2 for mid-size batches so the "parallel" batch axis actually has
    # something to shard across both v7x TensorCores.
    if b8 >= 2 * SUBLANE:
        tb_budget = min(tb_budget, _round_up((b8 + 1) // 2, SUBLANE))
    if direct_possible:
        # Zero-copy input path: tb must divide B exactly (no batch padding either).
        tb = SUBLANE
        d = SUBLANE
        limit = min(B, tb_budget)
        while d <= limit:
            if B % d == 0:
                tb = d
            d += SUBLANE
        if tb * 16 >= min(B, MAX_TB):         # reject pathological tiny tiles
            return tb, B, True
    tb = min(b8, tb_budget)
    return tb, _round_up(b8, tb), False


def _fused_forward(x_p, padded_params, tb, out_dtype):
    b_pad, in_pad = x_p.shape
    out_pad = padded_params[-1][0].shape[1]
    max_pad = max([in_pad] + [w.shape[1] for (w, _) in padded_params])
    n_layers = len(padded_params)
    grid = (b_pad // tb,)

    flat_inputs = [x_p]
    weight_bytes = 0
    for (w, b) in padded_params:
        flat_inputs += [w, b]
        weight_bytes += w.size * w.dtype.itemsize + b.size * b.dtype.itemsize

    in_isz = x_p.dtype.itemsize
    out_isz = jnp.dtype(out_dtype).itemsize
    flops = 2 * b_pad * sum(w.shape[0] * w.shape[1] for (w, _) in padded_params)
    bytes_accessed = x_p.size * in_isz + weight_bytes + b_pad * out_pad * out_isz

    def run(weight_buffer_count: int):
        def resident_spec(shape):
            # Constant index_map: the block is revisited, never re-fetched, so the
            # default second pipeline buffer is pure VMEM waste -> single-buffer it.
            if weight_buffer_count == 1:
                return pl.BlockSpec(shape, lambda i: (0, 0), pipeline_mode=pl.Buffered(1))
            return pl.BlockSpec(shape, lambda i: (0, 0))

        in_specs = [pl.BlockSpec((tb, in_pad), lambda i: (i, 0))]
        for (w, b) in padded_params:
            in_specs.append(resident_spec(w.shape))
            in_specs.append(resident_spec(b.shape))

        vmem_need = (weight_buffer_count * weight_bytes
                     + 2 * tb * in_pad * in_isz      # double-buffered input tile
                     + 2 * tb * out_pad * out_isz    # double-buffered output tile
                     + 2 * tb * max_pad * 4)         # acc + act temporaries

        return pl.pallas_call(
            functools.partial(_fused_mlp_kernel, n_layers=n_layers),
            out_shape=jax.ShapeDtypeStruct((b_pad, out_pad), out_dtype),
            grid=grid,
            in_specs=in_specs,
            out_specs=pl.BlockSpec((tb, out_pad), lambda i: (i, 0)),
            compiler_params=pltpu.CompilerParams(
                dimension_semantics=("parallel",),   # batch axis shards across TCs (v7x)
                vmem_limit_bytes=_vmem_limit_bytes(vmem_need),
            ),
            cost_estimate=pl.CostEstimate(flops=int(flops), transcendentals=0,
                                          bytes_accessed=int(bytes_accessed)),
        )(*flat_inputs)

    try:
        return run(1)        # single-buffered resident weights (preferred)
    except Exception:        # Pallas version without Buffered(1): default buffering
        return run(2)


def _streamed_forward(x_p, padded_params, tb, out_dtype):
    """Fallback: weights streamed tile-by-tile from HBM (layer-at-a-time K/N-tiled matmul)."""
    act = x_p
    n_layers = len(padded_params)
    for li, (w, b) in enumerate(padded_params):
        in_pad, out_pad = w.shape
        is_last = li == n_layers - 1
        layer_dtype = out_dtype if is_last else jnp.bfloat16
        b_pad = act.shape[0]
        tk = _pick_tile(in_pad)
        tn = _pick_tile(out_pad)
        grid = (b_pad // tb, out_pad // tn, in_pad // tk)

        a_isz = act.dtype.itemsize
        o_isz = jnp.dtype(layer_dtype).itemsize
        vmem_need = (2 * tb * tk * a_isz + 2 * tk * tn * 2 + 2 * tn * 4
                     + 2 * tb * tn * o_isz + tb * tn * 4)
        flops = 2 * b_pad * in_pad * out_pad
        bytes_accessed = (b_pad * in_pad * a_isz + w.size * 2 + b.size * 4
                          + b_pad * out_pad * o_isz)

        act = pl.pallas_call(
            functools.partial(_tiled_linear_kernel, apply_relu=not is_last),
            out_shape=jax.ShapeDtypeStruct((b_pad, out_pad), layer_dtype),
            grid=grid,
            in_specs=[pl.BlockSpec((tb, tk), lambda i, j, k: (i, k)),
                      pl.BlockSpec((tk, tn), lambda i, j, k: (k, j)),
                      pl.BlockSpec((1, tn), lambda i, j, k: (0, j))],
            out_specs=pl.BlockSpec((tb, tn), lambda i, j, k: (i, j)),
            scratch_shapes=[pltpu.VMEM((tb, tn), jnp.float32)],
            compiler_params=pltpu.CompilerParams(
                dimension_semantics=("parallel", "parallel", "arbitrary"),
                vmem_limit_bytes=_vmem_limit_bytes(vmem_need),
            ),
            cost_estimate=pl.CostEstimate(flops=int(flops), transcendentals=0,
                                          bytes_accessed=int(bytes_accessed)),
        )(act, w, b)
    return act


def mlp_forward(x, padded_params, input_dim, output_dim,
                out_dtype=jnp.bfloat16, force_streamed=False):
    """Pad/route the input, run the fused (or streamed fallback) kernels, slice the result."""
    B = x.shape[0]
    in_pad = padded_params[0][0].shape[0]
    out_pad = padded_params[-1][0].shape[1]
    max_pad = max([in_pad] + [w.shape[1] for (w, _) in padded_params])
    weight_bytes = sum(w.size * 2 + b.size * 4 for (w, b) in padded_params)
    out_isz = jnp.dtype(out_dtype).itemsize
    budget = _vmem_budget_bytes()

    plan = None if force_streamed else _plan_fused_batch(
        B, in_pad, out_pad, max_pad, weight_bytes, out_isz, input_dim, budget)

    if plan is not None:
        tb, b_pad, direct = plan
        if direct:
            x_p = x            # zero-copy: kernel reads f32 and casts to bf16 on the VPU
        else:
            x_p = jnp.zeros((b_pad, in_pad), jnp.bfloat16)
            x_p = x_p.at[:B, :input_dim].set(x.astype(jnp.bfloat16))
        out_padded = _fused_forward(x_p, padded_params, tb, out_dtype)
    else:
        b8 = _round_up(max(B, 1), SUBLANE)
        tb = min(b8, 512)
        b_pad = _round_up(b8, tb)
        if input_dim % LANE == 0 and b_pad == B:
            x_p = x
        else:
            x_p = jnp.zeros((b_pad, in_pad), jnp.bfloat16)
            x_p = x_p.at[:B, :input_dim].set(x.astype(jnp.bfloat16))
        out_padded = _streamed_forward(x_p, padded_params, tb, out_dtype)

    return out_padded[:B, :output_dim]


# --------------------------------------------------------------------------------------
# Module
# --------------------------------------------------------------------------------------
class LinearNetPallas:
    """JAX/Pallas port of craftdl.LinearNet's forward pass.

    Weights are stored 128-lane padded as bf16 (MXU input dtype); biases stay f32.
    The default forward runs every layer inside ONE fused pallas_call; networks whose
    weights would not fit resident in VMEM fall back to a streamed K/N-tiled per-layer
    kernel automatically.  Use out_dtype=jnp.float32 for an f32 output if fidelity
    matters more than output-DMA bytes.
    """

    def __init__(self, input_dim: int, hidden_dims: Union[int, List[int]], output_dim: int,
                 key: jax.Array, out_dtype=jnp.bfloat16):
        if isinstance(hidden_dims, int):
            hidden_dims = [hidden_dims]
        self.input_dim = input_dim
        self.hidden_dims = list(hidden_dims)
        self.output_dim = output_dim
        self.out_dtype = out_dtype

        dims = [input_dim] + self.hidden_dims + [output_dim]
        dim_pairs = [(dims[i], dims[i + 1]) for i in range(len(dims) - 1)]

        # Deterministic init mimicking torch.nn.Linear default (U(+/- 1/sqrt(fan_in))).
        self.params_f32 = []      # unpadded f32 copies (reference semantics)
        self.params_padded = []   # kernel params: W (in_pad, out_pad) bf16, b (1, out_pad) f32
        for (in_dim, out_dim) in dim_pairs:
            key, kw, kb = jax.random.split(key, 3)
            bound = 1.0 / (in_dim ** 0.5)
            w = jax.random.uniform(kw, (in_dim, out_dim), jnp.float32, -bound, bound)
            b = jax.random.uniform(kb, (1, out_dim), jnp.float32, -bound, bound)
            self.params_f32.append((w, b))
            in_p, out_p = _round_up(in_dim, LANE), _round_up(out_dim, LANE)
            w_p = jnp.zeros((in_p, out_p), jnp.float32).at[:in_dim, :out_dim].set(w)
            b_p = jnp.zeros((1, out_p), jnp.float32).at[:, :out_dim].set(b)
            self.params_padded.append((w_p.astype(jnp.bfloat16), b_p))

        # TODO(synk): fit() (SGD/DataLoader/BCE/CE training loop) is host-side training
        # logic, not part of the forward pass, and is intentionally not translated.

    def __call__(self, x: jax.Array, force_streamed: bool = False) -> jax.Array:
        if x.ndim == 2 and x.shape[1] != self.input_dim:
            raise ValueError(
                f"The input dimension expected by the network is {self.input_dim}, "
                f"but the input dimension of the provided tensor is {x.shape[1]}."
            )
        return mlp_forward(x, self.params_padded, self.input_dim, self.output_dim,
                           out_dtype=self.out_dtype, force_streamed=force_streamed)


# --------------------------------------------------------------------------------------
# References
# --------------------------------------------------------------------------------------
def _reference_forward_bf16(params_padded, x, input_dim, output_dim):
    """Plain-JAX replica of the kernel math (bf16 matmul inputs, f32 accumulation)."""
    in_pad = params_padded[0][0].shape[0]
    act = jnp.zeros((x.shape[0], in_pad), jnp.float32).at[:, :input_dim].set(
        x.astype(jnp.float32))
    act = act.astype(jnp.bfloat16)
    n = len(params_padded)
    acc = None
    for i, (w, b) in enumerate(params_padded):
        acc = jnp.dot(act.astype(jnp.float32), w.astype(jnp.float32)) + b
        if i < n - 1:
            acc = jnp.maximum(acc, 0.0)
            act = acc.astype(jnp.bfloat16)
    return acc[:, :output_dim]


def _reference_forward_f32(params_f32, x):
    """Pure f32 semantic reference (matches the PyTorch module's math)."""
    out = x
    n = len(params_f32)
    for i, (w, b) in enumerate(params_f32):
        out = out @ w + b
        if i < n - 1:
            out = jnp.maximum(out, 0.0)
    return out


if __name__ == "__main__":
    key = jax.random.PRNGKey(0)
    k_model, k_x = jax.random.split(key)

    # Small toy net (unaligned dims -> padded path).
    batch, input_dim, hidden_dims, output_dim = 8, 32, [64, 32], 16
    model = LinearNetPallas(input_dim, hidden_dims, output_dim, k_model)
    x = jax.random.normal(k_x, (batch, input_dim), jnp.float32)

    logits = jax.block_until_ready(model(x))
    assert logits.shape == (batch, output_dim)
    logits_f32 = logits.astype(jnp.float32)

    # Tight check vs. a JAX replica of the kernel math (bf16 matmuls, f32 acc).
    ref_bf16 = _reference_forward_bf16(model.params_padded, x, input_dim, output_dim)
    ref_bf16 = ref_bf16.astype(model.out_dtype).astype(jnp.float32)
    assert jnp.allclose(logits_f32, ref_bf16, atol=2e-2, rtol=2e-2)

    # Looser check vs. the pure-f32 semantics of the original module.
    ref_f32 = _reference_forward_f32(model.params_f32, x)
    assert jnp.allclose(logits_f32, ref_f32, atol=6e-2, rtol=6e-2)

    # Exercise the streamed-weight fallback path (forced; weights here are tiny).
    logits_streamed = jax.block_until_ready(model(x, force_streamed=True))
    assert jnp.allclose(logits_streamed.astype(jnp.float32), logits_f32, atol=2e-2, rtol=2e-2)

    # 128-aligned input / batch exercises the zero-copy f32-input path and grid >= 2.
    model2 = LinearNetPallas(256, [512], 128, k_model)
    x2 = jax.random.normal(jax.random.PRNGKey(1), (256, 256), jnp.float32)
    out2 = jax.block_until_ready(model2(x2))
    assert out2.shape == (256, 128)
    ref2 = _reference_forward_bf16(model2.params_padded, x2, 256, 128)
    ref2 = ref2.astype(model2.out_dtype).astype(jnp.float32)
    assert jnp.allclose(out2.astype(jnp.float32), ref2, atol=3e-2, rtol=3e-2)

    print("KERNEL_OK")
</pallas_src>

<mosaic_0001>
module attributes {stable_mosaic.version = 11 : i64} {
  func.func @_fused_mlp_kernel(%arg0: i32, %arg1: memref<8x128xbf16, #tpu.memory_space<vmem>>, %arg2: memref<128x128xbf16, #tpu.memory_space<vmem>>, %arg3: memref<1x128xf32, #tpu.memory_space<vmem>>, %arg4: memref<128x128xbf16, #tpu.memory_space<vmem>>, %arg5: memref<1x128xf32, #tpu.memory_space<vmem>>, %arg6: memref<128x128xbf16, #tpu.memory_space<vmem>>, %arg7: memref<1x128xf32, #tpu.memory_space<vmem>>, %arg8: memref<8x128xbf16, #tpu.memory_space<vmem>>) attributes {dimension_semantics = [#tpu.dimension_semantics<parallel>], iteration_bounds = array<i64: 1>, scalar_prefetch = 0 : i64, scratch_operands = 0 : i64, tpu.core_type = #tpu.core_type<tc>, window_params = [{transform_indices = @transform_0, window_bounds = array<i64: 8, 128>}, {pipeline_mode = #tpu.pipeline_mode<synchronous>, transform_indices = @transform_1, window_bounds = array<i64: 128, 128>}, {pipeline_mode = #tpu.pipeline_mode<synchronous>, transform_indices = @transform_2, window_bounds = array<i64: 1, 128>}, {pipeline_mode = #tpu.pipeline_mode<synchronous>, transform_indices = @transform_3, window_bounds = array<i64: 128, 128>}, {pipeline_mode = #tpu.pipeline_mode<synchronous>, transform_indices = @transform_4, window_bounds = array<i64: 1, 128>}, {pipeline_mode = #tpu.pipeline_mode<synchronous>, transform_indices = @transform_5, window_bounds = array<i64: 128, 128>}, {pipeline_mode = #tpu.pipeline_mode<synchronous>, transform_indices = @transform_6, window_bounds = array<i64: 1, 128>}, {transform_indices = @transform_7, window_bounds = array<i64: 8, 128>}]} {
    %c0 = arith.constant 0 : index
    %c0_0 = arith.constant 0 : index
    %0 = vector.load %arg1[%c0, %c0_0] : memref<8x128xbf16, #tpu.memory_space<vmem>>, vector<8x128xbf16>
    %c0_1 = arith.constant 0 : index
    %c0_2 = arith.constant 0 : index
    %1 = vector.load %arg2[%c0_1, %c0_2] : memref<128x128xbf16, #tpu.memory_space<vmem>>, vector<128x128xbf16>
    %c0_3 = arith.constant 0 : index
    %c0_4 = arith.constant 0 : index
    %2 = vector.load %arg3[%c0_3, %c0_4] : memref<1x128xf32, #tpu.memory_space<vmem>>, vector<1x128xf32>
    %cst = arith.constant dense<0.000000e+00> : vector<8x128xf32>
    %3 = tpu.matmul %0, %1, %cst {dimension_numbers = #tpu.dot_dimension_numbers<[1], [0], [0], [1], [0, 0, 1, 1], [], []>} : vector<8x128xbf16>, vector<128x128xbf16>, vector<8x128xf32> -> vector<8x128xf32>
    %4 = vector.broadcast %2 : vector<1x128xf32> to vector<8x128xf32>
    %5 = arith.addf %3, %4 : vector<8x128xf32>
    %cst_5 = arith.constant 0.000000e+00 : f32
    %6 = vector.broadcast %cst_5 : f32 to vector<8x128xf32>
    %7 = arith.maximumf %5, %6 : vector<8x128xf32>
    %8 = arith.truncf %7 : vector<8x128xf32> to vector<8x128xbf16>
    %c0_6 = arith.constant 0 : index
    %c0_7 = arith.constant 0 : index
    %9 = vector.load %arg4[%c0_6, %c0_7] : memref<128x128xbf16, #tpu.memory_space<vmem>>, vector<128x128xbf16>
    %c0_8 = arith.constant 0 : index
    %c0_9 = arith.constant 0 : index
    %10 = vector.load %arg5[%c0_8, %c0_9] : memref<1x128xf32, #tpu.memory_space<vmem>>, vector<1x128xf32>
    %cst_10 = arith.constant dense<0.000000e+00> : vector<8x128xf32>
    %11 = tpu.matmul %8, %9, %cst_10 {dimension_numbers = #tpu.dot_dimension_numbers<[1], [0], [0], [1], [0, 0, 1, 1], [], []>} : vector<8x128xbf16>, vector<128x128xbf16>, vector<8x128xf32> -> vector<8x128xf32>
    %12 = vector.broadcast %10 : vector<1x128xf32> to vector<8x128xf32>
    %13 = arith.addf %11, %12 : vector<8x128xf32>
    %cst_11 = arith.constant 0.000000e+00 : f32
    %14 = vector.broadcast %cst_11 : f32 to vector<8x128xf32>
    %15 = arith.maximumf %13, %14 : vector<8x128xf32>
    %16 = arith.truncf %15 : vector<8x128xf32> to vector<8x128xbf16>
    %c0_12 = arith.constant 0 : index
    %c0_13 = arith.constant 0 : index
    %17 = vector.load %arg6[%c0_12, %c0_13] : memref<128x128xbf16, #tpu.memory_space<vmem>>, vector<128x128xbf16>
    %c0_14 = arith.constant 0 : index
    %c0_15 = arith.constant 0 : index
    %18 = vector.load %arg7[%c0_14, %c0_15] : memref<1x128xf32, #tpu.memory_space<vmem>>, vector<1x128xf32>
    %cst_16 = arith.constant dense<0.000000e+00> : vector<8x128xf32>
    %19 = tpu.matmul %16, %17, %cst_16 {dimension_numbers = #tpu.dot_dimension_numbers<[1], [0], [0], [1], [0, 0, 1, 1], [], []>} : vector<8x128xbf16>, vector<128x128xbf16>, vector<8x128xf32> -> vector<8x128xf32>
    %20 = vector.broadcast %18 : vector<1x128xf32> to vector<8x128xf32>
    %21 = arith.addf %19, %20 : vector<8x128xf32>
    %22 = arith.truncf %21 : vector<8x128xf32> to vector<8x128xbf16>
    %c0_17 = arith.constant 0 : index
    %c0_18 = arith.constant 0 : index
    %23 = vector.load %arg8[%c0_17, %c0_18] : memref<8x128xbf16, #tpu.memory_space<vmem>>, vector<8x128xbf16>
    tpu.vector_store %arg8[%c0_17, %c0_18], %22 {strides = array<i32>} : memref<8x128xbf16, #tpu.memory_space<vmem>>, vector<8x128xbf16>,
    return
  }
  func.func @transform_0(%arg0: i32) -> (i32, i32) {
    %c0_i32 = arith.constant 0 : i32
    %c0_i32_0 = arith.constant 0 : i32
    return %arg0, %c0_i32 : i32, i32
  }
  func.func @transform_1(%arg0: i32) -> (i32, i32) {
    %c0_i32 = arith.constant 0 : i32
    %c0_i32_0 = arith.constant 0 : i32
    %c0_i32_1 = arith.constant 0 : i32
    return %c0_i32, %c0_i32_0 : i32, i32
  }
  func.func @transform_2(%arg0: i32) -> (i32, i32) {
    %c0_i32 = arith.constant 0 : i32
    %c0_i32_0 = arith.constant 0 : i32
    %c0_i32_1 = arith.constant 0 : i32
    return %c0_i32, %c0_i32_0 : i32, i32
  }
  func.func @transform_3(%arg0: i32) -> (i32, i32) {
    %c0_i32 = arith.constant 0 : i32
    %c0_i32_0 = arith.constant 0 : i32
    %c0_i32_1 = arith.constant 0 : i32
    return %c0_i32, %c0_i32_0 : i32, i32
  }
  func.func @transform_4(%arg0: i32) -> (i32, i32) {
    %c0_i32 = arith.constant 0 : i32
    %c0_i32_0 = arith.constant 0 : i32
    %c0_i32_1 = arith.constant 0 : i32
    return %c0_i32, %c0_i32_0 : i32, i32
  }
  func.func @transform_5(%arg0: i32) -> (i32, i32) {
    %c0_i32 = arith.constant 0 : i32
    %c0_i32_0 = arith.constant 0 : i32
    %c0_i32_1 = arith.constant 0 : i32
    return %c0_i32, %c0_i32_0 : i32, i32
  }
  func.func @transform_6(%arg0: i32) -> (i32, i32) {
    %c0_i32 = arith.constant 0 : i32
    %c0_i32_0 = arith.constant 0 : i32
    %c0_i32_1 = arith.constant 0 : i32
    return %c0_i32, %c0_i32_0 : i32, i32
  }
  func.func @transform_7(%arg0: i32) -> (i32, i32) {
    %c0_i32 = arith.constant 0 : i32
    %c0_i32_0 = arith.constant 0 : i32
    return %arg0, %c0_i32 : i32, i32
  }
}

module attributes {stable_mosaic.version = 11 : i64} {
  func.func @_fused_mlp_kernel(%arg0: i32, %arg1: memref<8x128xbf16, #tpu.memory_space<vmem>>, %arg2: memref<128x128xbf16, #tpu.memory_space<vmem>>, %arg3: memref<1x128xf32, #tpu.memory_space<vmem>>, %arg4: memref<128x128xbf16, #tpu.memory_space<vmem>>, %arg5: memref<1x128xf32, #tpu.memory_space<vmem>>, %arg6: memref<128x128xbf16, #tpu.memory_space<vmem>>, %arg7: memref<1x128xf32, #tpu.memory_space<vmem>>, %arg8: memref<8x128xbf16, #tpu.memory_space<vmem>>) attributes {dimension_semantics = [#tpu.dimension_semantics<parallel>], iteration_bounds = array<i64: 1>, scalar_prefetch = 0 : i64, scratch_operands = 0 : i64, tpu.core_type = #tpu.core_type<tc>, window_params = [{transform_indices = @transform_0, window_bounds = array<i64: 8, 128>}, {pipeline_mode = #tpu.pipeline_mode<synchronous>, transform_indices = @transform_1, window_bounds = array<i64: 128, 128>}, {pipeline_mode = #tpu.pipeline_mode<synchronous>, transform_indices = @transform_2, window_bounds = array<i64: 1, 128>}, {pipeline_mode = #tpu.pipeline_mode<synchronous>, transform_indices = @transform_3, window_bounds = array<i64: 128, 128>}, {pipeline_mode = #tpu.pipeline_mode<synchronous>, transform_indices = @transform_4, window_bounds = array<i64: 1, 128>}, {pipeline_mode = #tpu.pipeline_mode<synchronous>, transform_indices = @transform_5, window_bounds = array<i64: 128, 128>}, {pipeline_mode = #tpu.pipeline_mode<synchronous>, transform_indices = @transform_6, window_bounds = array<i64: 1, 128>}, {transform_indices = @transform_7, window_bounds = array<i64: 8, 128>}]} {
    %c0 = arith.constant 0 : index
    %c0_0 = arith.constant 0 : index
    %0 = vector.load %arg1[%c0, %c0_0] : memref<8x128xbf16, #tpu.memory_space<vmem>>, vector<8x128xbf16>
    %c0_1 = arith.constant 0 : index
    %c0_2 = arith.constant 0 : index
    %1 = vector.load %arg2[%c0_1, %c0_2] : memref<128x128xbf16, #tpu.memory_space<vmem>>, vector<128x128xbf16>
    %c0_3 = arith.constant 0 : index
    %c0_4 = arith.constant 0 : index
    %2 = vector.load %arg3[%c0_3, %c0_4] : memref<1x128xf32, #tpu.memory_space<vmem>>, vector<1x128xf32>
    %cst = arith.constant dense<0.000000e+00> : vector<8x128xf32>
    %3 = tpu.matmul %0, %1, %cst {dimension_numbers = #tpu.dot_dimension_numbers<[1], [0], [0], [1], [0, 0, 1, 1], [], []>} : vector<8x128xbf16>, vector<128x128xbf16>, vector<8x128xf32> -> vector<8x128xf32>
    %4 = vector.broadcast %2 : vector<1x128xf32> to vector<8x128xf32>
    %5 = arith.addf %3, %4 : vector<8x128xf32>
    %cst_5 = arith.constant 0.000000e+00 : f32
    %6 = vector.broadcast %cst_5 : f32 to vector<8x128xf32>
    %7 = arith.maximumf %5, %6 : vector<8x128xf32>
    %8 = arith.truncf %7 : vector<8x128xf32> to vector<8x128xbf16>
    %c0_6 = arith.constant 0 : index
    %c0_7 = arith.constant 0 : index
    %9 = vector.load %arg4[%c0_6, %c0_7] : memref<128x128xbf16, #tpu.memory_space<vmem>>, vector<128x128xbf16>
    %c0_8 = arith.constant 0 : index
    %c0_9 = arith.constant 0 : index
    %10 = vector.load %arg5[%c0_8, %c0_9] : memref<1x128xf32, #tpu.memory_space<vmem>>, vector<1x128xf32>
    %cst_10 = arith.constant dense<0.000000e+00> : vector<8x128xf32>
    %11 = tpu.matmul %8, %9, %cst_10 {dimension_numbers = #tpu.dot_dimension_numbers<[1], [0], [0], [1], [0, 0, 1, 1], [], []>} : vector<8x128xbf16>, vector<128x128xbf16>, vector<8x128xf32> -> vector<8x128xf32>
    %12 = vector.broadcast %10 : vector<1x128xf32> to vector<8x128xf32>
    %13 = arith.addf %11, %12 : vector<8x128xf32>
    %cst_11 = arith.constant 0.000000e+00 : f32
    %14 = vector.broadcast %cst_11 : f32 to vector<8x128xf32>
    %15 = arith.maximumf %13, %14 : vector<8x128xf32>
    %16 = arith.truncf %15 : vector<8x128xf32> to vector<8x128xbf16>
    %c0_12 = arith.constant 0 : index
    %c0_13 = arith.constant 0 : index
    %17 = vector.load %arg6[%c0_12, %c0_13] : memref<128x128xbf16, #tpu.memory_space<vmem>>, vector<128x128xbf16>
    %c0_14 = arith.constant 0 : index
    %c0_15 = arith.constant 0 : index
    %18 = vector.load %arg7[%c0_14, %c0_15] : memref<1x128xf32, #tpu.memory_space<vmem>>, vector<1x128xf32>
    %cst_16 = arith.constant dense<0.000000e+00> : vector<8x128xf32>
    %19 = tpu.matmul %16, %17, %cst_16 {dimension_numbers = #tpu.dot_dimension_numbers<[1], [0], [0], [1], [0, 0, 1, 1], [], []>} : vector<8x128xbf16>, vector<128x128xbf16>, vector<8x128xf32> -> vector<8x128xf32>
    %20 = vector.broadcast %18 : vector<1x128xf32> to vector<8x128xf32>
    %21 = arith.addf %19, %20 : vector<8x128xf32>
    %22 = arith.truncf %21 : vector<8x128xf32> to vector<8x128xbf16>
    %c0_17 = arith.constant 0 : index
    %c0_18 = arith.constant 0 : index
    %23 = vector.load %arg8[%c0_17, %c0_18] : memref<8x128xbf16, #tpu.memory_space<vmem>>, vector<8x128xbf16>
    tpu.vector_store %arg8[%c0_17, %c0_18], %22 {strides = array<i32>} : memref<8x128xbf16, #tpu.memory_space<vmem>>, vector<8x128xbf16>,
    return
  }
  func.func @transform_0(%arg0: i32) -> (i32, i32) {
    %c0_i32 = arith.constant 0 : i32
    %c0_i32_0 = arith.constant 0 : i32
    return %arg0, %c0_i32 : i32, i32
  }
  func.func @transform_1(%arg0: i32) -> (i32, i32) {
    %c0_i32 = arith.constant 0 : i32
    %c0_i32_0 = arith.constant 0 : i32
    %c0_i32_1 = arith.constant 0 : i32
    return %c0_i32, %c0_i32_0 : i32, i32
  }
  func.func @transform_2(%arg0: i32) -> (i32, i32) {
    %c0_i32 = arith.constant 0 : i32
    %c0_i32_0 = arith.constant 0 : i32
    %c0_i32_1 = arith.constant 0 : i32
    return %c0_i32, %c0_i32_0 : i32, i32
  }
  func.func @transform_3(%arg0: i32) -> (i32, i32) {
    %c0_i32 = arith.constant 0 : i32
    %c0_i32_0 = arith.constant 0 : i32
    %c0_i32_1 = arith.constant 0 : i32
    return %c0_i32, %c0_i32_0 : i32, i32
  }
  func.func @transform_4(%arg0: i32) -> (i32, i32) {
    %c0_i32 = arith.constant 0 : i32
    %c0_i32_0 = arith.constant 0 : i32
    %c0_i32_1 = arith.constant 0 : i32
    return %c0_i32, %c0_i32_0 : i32, i32
  }
  func.func @transform_5(%arg0: i32) -> (i32, i32) {
    %c0_i32 = arith.constant 0 : i32
    %c0_i32_0 = arith.constant 0 : i32
    %c0_i32_1 = arith.constant 0 : i32
    return %c0_i32, %c0_i32_0 : i32, i32
  }
  func.func @transform_6(%arg0: i32) -> (i32, i32) {
    %c0_i32 = arith.constant 0 : i32
    %c0_i32_0 = arith.constant 0 : i32
    %c0_i32_1 = arith.constant 0 : i32
    return %c0_i32, %c0_i32_0 : i32, i32
  }
  func.func @transform_7(%arg0: i32) -> (i32, i32) {
    %c0_i32 = arith.constant 0 : i32
    %c0_i32_0 = arith.constant 0 : i32
    return %arg0, %c0_i32 : i32, i32
  }
}

</mosaic_0001>

<llo_original>
// kernel: tpu_custom_call.1
$region0: #{tpu_custom_call.1}
  #allocation0 [shape = 'u32[]', space=smem, size = 0x4, offset = 0x4, fixed_abs, tag = 'smem constant byte address 0x4 - core index']
  #allocation1 [shape = 'u32[144,128]{1,0:T(1,128)}', space=vmem, size = 0x12000, scoped, tag = 'internal scratch']
  %s0 = inlined_call_operand.hbm [shape: bf16[8,128], index: 0, kind: input, shape index: {}]
  %s1 = inlined_call_operand.hbm [shape: bf16[128,128], index: 1, kind: input, shape index: {}]
  %s2 = inlined_call_operand.vmem [shape: f32[1,128], index: 2, kind: input, shape index: {}]
  %s3 = inlined_call_operand.hbm [shape: bf16[128,128], index: 3, kind: input, shape index: {}]
  %s4 = inlined_call_operand.vmem [shape: f32[1,128], index: 4, kind: input, shape index: {}]
  %s5 = inlined_call_operand.hbm [shape: bf16[128,128], index: 5, kind: input, shape index: {}]
  %s6 = inlined_call_operand.vmem [shape: f32[1,128], index: 6, kind: input, shape index: {}]
  %s7 = inlined_call_operand.hbm [shape: bf16[8,128], index: 7, kind: output, shape index: {}]
  %s8 = sld [smem:[#allocation0]]
  $region54: #{tpu_custom_call.1} parent=0
    _
  %s10 = ssub.s32 1, %s8
  %s11 = scalar_select 0, %s10, %s8
  $region1: #{tpu_custom_call.1} parent=0
    #allocation2 [shape = 'u8[2048]{0}', space=vmem, size = 0x800, scoped, tag = 'input window, operand 0, single buffered']
    #allocation3 [shape = 's32[1]{0}', space=sflag, size = 0x4, scoped, tag = 'scoped memory for tpu_custom_call.1']
    #allocation4 [shape = 's32[1]{0}', space=sflag, size = 0x4, scoped, tag = 'scoped memory for tpu_custom_call.1']
    #allocation5 [shape = 'u8[32768]{0}', space=vmem, size = 0x8000, scoped, tag = 'input window, operand 1, single buffered']
    #allocation6 [shape = 's32[1]{0}', space=sflag, size = 0x4, scoped, tag = 'scoped memory for tpu_custom_call.1']
    #allocation7 [shape = 'u8[32768]{0}', space=vmem, size = 0x8000, scoped, tag = 'input window, operand 3, single buffered']
    #allocation8 [shape = 'u8[32768]{0}', space=vmem, size = 0x8000, scoped, tag = 'input window, operand 5, single buffered']
    #allocation9 [shape = 's32[1]{0}', space=sflag, size = 0x4, scoped, tag = 'scoped memory for tpu_custom_call.1']
    #allocation10 [shape = 'u8[2048]{0}', space=vmem, size = 0x800, scoped, tag = 'output window, operand 0, single buffered']
    %12 = vsyncpa [#allocation3], 0
    %13 = vsyncpa [#allocation6], 0
    %14 = vsyncpa [#allocation9], 0
    %15 = vsyncpa [#allocation4], 0
    // Predicated region
    $region2: #{tpu_custom_call.1} parent=1 // pred_check
      _
    $region3: #{tpu_custom_call.1} parent=1 // pred_check_branch
      %17 = sbr.rel (0) target = $region5
    $region4: #{tpu_custom_call.1} parent=1 // pred_region
      %s19 = ssub.s32 64, 64
      %20 = vsyncadd [#allocation3], %s19
      %s22 = sshll.u32 [#allocation2], 4
      %s23 = int_to_ptr.vmem [resolvable:$true] %s22
      %25 = dma.hbm_to_vmem [thread:$0]  %s0, 64, %s23, [#allocation3]
    $region5: #{tpu_custom_call.1} parent=1 // pred_fallthru
      _
    // Predicated region
    $region6: #{tpu_custom_call.1} parent=1 // pred_check
      _
    $region7: #{tpu_custom_call.1} parent=1 // pred_check_branch
      %27 = sbr.rel (0) target = $region9
    $region8: #{tpu_custom_call.1} parent=1 // pred_region
      %s29 = ssub.s32 1024, 1024
      %30 = vsyncadd [#allocation6], %s29
      %s31 = sshll.u32 [#allocation5], 4
      %s32 = int_to_ptr.vmem [resolvable:$true] %s31
      %37 = dma.hbm_to_vmem [thread:$0]  %s1, 1024, %s32, [#allocation6], 64, 64, 4
    $region9: #{tpu_custom_call.1} parent=1 // pred_fallthru
      _
    // Predicated region
    $region10: #{tpu_custom_call.1} parent=1 // pred_check
      _
    $region11: #{tpu_custom_call.1} parent=1 // pred_check_branch
      %39 = sbr.rel (0) target = $region13
    $region12: #{tpu_custom_call.1} parent=1 // pred_region
      _
    $region13: #{tpu_custom_call.1} parent=1 // pred_fallthru
      _
    // Predicated region
    $region14: #{tpu_custom_call.1} parent=1 // pred_check
      _
    $region15: #{tpu_custom_call.1} parent=1 // pred_check_branch
      %41 = sbr.rel (0) target = $region17
    $region16: #{tpu_custom_call.1} parent=1 // pred_region
      %s43 = ssub.s32 1024, 1024
      %44 = vsyncadd [#allocation6], %s43
      %s45 = sshll.u32 [#allocation7], 4
      %s46 = int_to_ptr.vmem [resolvable:$true] %s45
      %51 = dma.hbm_to_vmem [thread:$0]  %s3, 1024, %s46, [#allocation6], 64, 64, 4
    $region17: #{tpu_custom_call.1} parent=1 // pred_fallthru
      _
    // Predicated region
    $region18: #{tpu_custom_call.1} parent=1 // pred_check
      _
    $region19: #{tpu_custom_call.1} parent=1 // pred_check_branch
      %53 = sbr.rel (0) target = $region21
    $region20: #{tpu_custom_call.1} parent=1 // pred_region
      _
    $region21: #{tpu_custom_call.1} parent=1 // pred_fallthru
      _
    // Predicated region
    $region22: #{tpu_custom_call.1} parent=1 // pred_check
      _
    $region23: #{tpu_custom_call.1} parent=1 // pred_check_branch
      %55 = sbr.rel (0) target = $region25
    $region24: #{tpu_custom_call.1} parent=1 // pred_region
      %s57 = ssub.s32 1024, 1024
      %58 = vsyncadd [#allocation9], %s57
      %s59 = sshll.u32 [#allocation8], 4
      %s60 = int_to_ptr.vmem [resolvable:$true] %s59
      %65 = dma.hbm_to_vmem [thread:$0]  %s5, 1024, %s60, [#allocation9], 64, 64, 4
    $region25: #{tpu_custom_call.1} parent=1 // pred_fallthru
      _
    // Predicated region
    $region26: #{tpu_custom_call.1} parent=1 // pred_check
      _
    $region27: #{tpu_custom_call.1} parent=1 // pred_check_branch
      %67 = sbr.rel (0) target = $region29
    $region28: #{tpu_custom_call.1} parent=1 // pred_region
      _
    $region29: #{tpu_custom_call.1} parent=1 // pred_fallthru
      _
    // Predicated region
    $region30: #{tpu_custom_call.1} parent=1 // pred_check
      _
    $region31: #{tpu_custom_call.1} parent=1 // pred_check_branch
      %69 = sbr.rel (0) target = $region33
    $region32: #{tpu_custom_call.1} parent=1 // pred_region
      %70 = dma.done [#allocation3], 64
    $region33: #{tpu_custom_call.1} parent=1 // pred_fallthru
      _
    // Predicated region
    $region34: #{tpu_custom_call.1} parent=1 // pred_check
      _
    $region35: #{tpu_custom_call.1} parent=1 // pred_check_branch
      %72 = sbr.rel (0) target = $region37
    $region36: #{tpu_custom_call.1} parent=1 // pred_region
      %73 = dma.done [#allocation6], 1024
    $region37: #{tpu_custom_call.1} parent=1 // pred_fallthru
      _
    // Predicated region
    $region38: #{tpu_custom_call.1} parent=1 // pred_check
      _
    $region39: #{tpu_custom_call.1} parent=1 // pred_check_branch
      %75 = sbr.rel (0) target = $region41
    $region40: #{tpu_custom_call.1} parent=1 // pred_region
      %76 = dma.done [#allocation6], 1024
    $region41: #{tpu_custom_call.1} parent=1 // pred_fallthru
      _
    // Predicated region
    $region42: #{tpu_custom_call.1} parent=1 // pred_check
      _
    $region43: #{tpu_custom_call.1} parent=1 // pred_check_branch
      %78 = sbr.rel (0) target = $region45
    $region44: #{tpu_custom_call.1} parent=1 // pred_region
      %79 = dma.done [#allocation9], 1024
    $region45: #{tpu_custom_call.1} parent=1 // pred_fallthru
      _
    %v81 = vld [vmem:[#allocation2] sm:$0xf]
    %v82 = vld [vmem:[#allocation5] sm:$0xf]
    %v83 = vld [vmem:[#allocation5 + $0x4] sm:$0xf]
    %v84 = vld [vmem:[#allocation5 + $0x8] sm:$0xf]
    %v85 = vld [vmem:[#allocation5 + $0xc] sm:$0xf]
    %v86 = vld [vmem:[#allocation5 + $0x10] sm:$0xf]
    %v87 = vld [vmem:[#allocation5 + $0x14] sm:$0xf]
    %v88 = vld [vmem:[#allocation5 + $0x18] sm:$0xf]
    %v89 = vld [vmem:[#allocation5 + $0x1c] sm:$0xf]
    %v90 = vld [vmem:[#allocation5 + $0x20] sm:$0xf]
    %v91 = vld [vmem:[#allocation5 + $0x24] sm:$0xf]
    %v92 = vld [vmem:[#allocation5 + $0x28] sm:$0xf]
    %v93 = vld [vmem:[#allocation5 + $0x2c] sm:$0xf]
    %v94 = vld [vmem:[#allocation5 + $0x30] sm:$0xf]
    %v95 = vld [vmem:[#allocation5 + $0x34] sm:$0xf]
    %v96 = vld [vmem:[#allocation5 + $0x38] sm:$0xf]
    %v97 = vld [vmem:[#allocation5 + $0x3c] sm:$0xf]
    %v98 = vld [vmem:[%s2] sm:$0x1]
    %v100 = vlaneseq
    %v101 = vshrl.u32 %v100, 7
    %v102 = vsub.s32 0, %v101
    %v103 = vrot.slane %v98, %v102
    %v121 = vunpack.c.l.b16 %v82
    %v122 = vunpack.c.l.b16 %v83
    %v123 = vunpack.c.l.b16 %v84
    %v124 = vunpack.c.l.b16 %v85
    %v125 = vunpack.c.l.b16 %v86
    %v126 = vunpack.c.l.b16 %v87
    %v127 = vunpack.c.l.b16 %v88
    %v128 = vunpack.c.l.b16 %v89
    %v129 = vunpack.c.l.b16 %v90
    %v130 = vunpack.c.l.b16 %v91
    %v131 = vunpack.c.l.b16 %v92
    %v132 = vunpack.c.l.b16 %v93
    %v133 = vunpack.c.l.b16 %v94
    %v134 = vunpack.c.l.b16 %v95
    %v135 = vunpack.c.l.b16 %v96
    %v136 = vunpack.c.l.b16 %v97
    %v137 = vpack.c.b16 %v122, %v121
    %v138 = vpack.c.b16 %v124, %v123
    %v139 = vpack.c.b16 %v126, %v125
    %v140 = vpack.c.b16 %v128, %v127
    %v141 = vpack.c.b16 %v130, %v129
    %v142 = vpack.c.b16 %v132, %v131
    %v143 = vpack.c.b16 %v134, %v133
    %v144 = vpack.c.b16 %v136, %v135
    %153 = vmatprep.subr.bf16.mxu0 0
    %154 = vmatpush1.bf16.msra.mxu0 %v144
    %155 = vmatprep.subr.bf16.mxu0 0
    %156 = vmatpush1.bf16.msra.mxu0 %v143
    %157 = vmatprep.subr.bf16.mxu0 0
    %158 = vmatpush1.bf16.msra.mxu0 %v142
    %159 = vmatprep.subr.bf16.mxu0 0
    %160 = vmatpush1.bf16.msra.mxu0 %v141
    %161 = vmatprep.subr.bf16.mxu0 0
    %162 = vmatpush1.bf16.msra.mxu0 %v140
    %163 = vmatprep.subr.bf16.mxu0 0
    %164 = vmatpush1.bf16.msra.mxu0 %v139
    %165 = vmatprep.subr.bf16.mxu0 0
    %166 = vmatpush1.bf16.msra.mxu0 %v138
    %167 = vmatprep.subr.bf16.mxu0 0
    %168 = vmatpush1.bf16.msra.mxu0 %v137
    %169 = vmatprep.subr.bf16.mxu0 0
    %170 = vmatpush2.bf16.msra.mxu0 0
    %171 = vmatprep.subr.bf16.mxu0 0
    %172 = vmatpush2.bf16.msra.mxu0 0
    %173 = vmatprep.subr.bf16.mxu0 0
    %174 = vmatpush2.bf16.msra.mxu0 0
    %175 = vmatprep.subr.bf16.mxu0 0
    %176 = vmatpush2.bf16.msra.mxu0 0
    %177 = vmatprep.subr.bf16.mxu0 0
    %178 = vmatpush2.bf16.msra.mxu0 0
    %179 = vmatprep.subr.bf16.mxu0 0
    %180 = vmatpush2.bf16.msra.mxu0 0
    %181 = vmatprep.subr.bf16.mxu0 0
    %182 = vmatpush2.bf16.msra.mxu0 0
    %183 = vmatprep.subr.bf16.mxu0 0
    %184 = vmatpush2.bf16.msra.mxu0 0
    %185 = vmatprep.mubr.bf16.mxu0 0
    %186 = vmatmul.mubr.bf16.gmra.mxu0 %v81
    %v187 = vpop.f32.mrf.mxu0
    %v188 = vadd.f32 %v103, %v187
    %v189 = vpop.f32.mrf.mxu0
    %v190 = vpop.f32.mrf.mxu0
    %v191 = vpop.f32.mrf.mxu0
    %192 = vdwg.mxu0
    %v193 = vmax.f32 %v188, 0.0
    %v194 = vpack.c.bf16 %v193, %v193
    %v195 = vld [vmem:[#allocation7] sm:$0xf]
    %v196 = vld [vmem:[#allocation7 + $0x4] sm:$0xf]
    %v197 = vld [vmem:[#allocation7 + $0x8] sm:$0xf]
    %v198 = vld [vmem:[#allocation7 + $0xc] sm:$0xf]
    %v199 = vld [vmem:[#allocation7 + $0x10] sm:$0xf]
    %v200 = vld [vmem:[#allocation7 + $0x14] sm:$0xf]
    %v201 = vld [vmem:[#allocation7 + $0x18] sm:$0xf]
    %v202 = vld [vmem:[#allocation7 + $0x1c] sm:$0xf]
    %v203 = vld [vmem:[#allocation7 + $0x20] sm:$0xf]
    %v204 = vld [vmem:[#allocation7 + $0x24] sm:$0xf]
    %v205 = vld [vmem:[#allocation7 + $0x28] sm:$0xf]
    %v206 = vld [vmem:[#allocation7 + $0x2c] sm:$0xf]
    %v207 = vld [vmem:[#allocation7 + $0x30] sm:$0xf]
    %v208 = vld [vmem:[#allocation7 + $0x34] sm:$0xf]
    %v209 = vld [vmem:[#allocation7 + $0x38] sm:$0xf]
    %v210 = vld [vmem:[#allocation7 + $0x3c] sm:$0xf]
    %v211 = vld [vmem:[%s4] sm:$0x1]
    %v213 = vlaneseq
    %v214 = vshrl.u32 %v213, 7
    %v215 = vsub.s32 0, %v214
    %v216 = vrot.slane %v211, %v215
    %v234 = vunpack.c.l.b16 %v195
    %v235 = vunpack.c.l.b16 %v196
    %v236 = vunpack.c.l.b16 %v197
    %v237 = vunpack.c.l.b16 %v198
    %v238 = vunpack.c.l.b16 %v199
    %v239 = vunpack.c.l.b16 %v200
    %v240 = vunpack.c.l.b16 %v201
    %v241 = vunpack.c.l.b16 %v202
    %v242 = vunpack.c.l.b16 %v203
    %v243 = vunpack.c.l.b16 %v204
    %v244 = vunpack.c.l.b16 %v205
    %v245 = vunpack.c.l.b16 %v206
    %v246 = vunpack.c.l.b16 %v207
    %v247 = vunpack.c.l.b16 %v208
    %v248 = vunpack.c.l.b16 %v209
    %v249 = vunpack.c.l.b16 %v210
    %v250 = vpack.c.b16 %v235, %v234
    %v251 = vpack.c.b16 %v237, %v236
    %v252 = vpack.c.b16 %v239, %v238
    %v253 = vpack.c.b16 %v241, %v240
    %v254 = vpack.c.b16 %v243, %v242
    %v255 = vpack.c.b16 %v245, %v244
    %v256 = vpack.c.b16 %v247, %v246
    %v257 = vpack.c.b16 %v249, %v248
    %266 = vmatprep.subr.bf16.mxu0 0
    %267 = vmatpush1.bf16.msra.mxu0 %v257
    %268 = vmatprep.subr.bf16.mxu0 0
    %269 = vmatpush1.bf16.msra.mxu0 %v256
    %270 = vmatprep.subr.bf16.mxu0 0
    %271 = vmatpush1.bf16.msra.mxu0 %v255
    %272 = vmatprep.subr.bf16.mxu0 0
    %273 = vmatpush1.bf16.msra.mxu0 %v254
    %274 = vmatprep.subr.bf16.mxu0 0
    %275 = vmatpush1.bf16.msra.mxu0 %v253
    %276 = vmatprep.subr.bf16.mxu0 0
    %277 = vmatpush1.bf16.msra.mxu0 %v252
    %278 = vmatprep.subr.bf16.mxu0 0
    %279 = vmatpush1.bf16.msra.mxu0 %v251
    %280 = vmatprep.subr.bf16.mxu0 0
    %281 = vmatpush1.bf16.msra.mxu0 %v250
    %282 = vmatprep.subr.bf16.mxu0 0
    %283 = vmatpush2.bf16.msra.mxu0 0
    %284 = vmatprep.subr.bf16.mxu0 0
    %285 = vmatpush2.bf16.msra.mxu0 0
    %286 = vmatprep.subr.bf16.mxu0 0
    %287 = vmatpush2.bf16.msra.mxu0 0
    %288 = vmatprep.subr.bf16.mxu0 0
    %289 = vmatpush2.bf16.msra.mxu0 0
    %290 = vmatprep.subr.bf16.mxu0 0
    %291 = vmatpush2.bf16.msra.mxu0 0
    %292 = vmatprep.subr.bf16.mxu0 0
    %293 = vmatpush2.bf16.msra.mxu0 0
    %294 = vmatprep.subr.bf16.mxu0 0
    %295 = vmatpush2.bf16.msra.mxu0 0
    %296 = vmatprep.subr.bf16.mxu0 0
    %297 = vmatpush2.bf16.msra.mxu0 0
    %298 = vmatprep.mubr.bf16.mxu0 0
    %299 = vmatmul.mubr.bf16.gmra.mxu0 %v194
    %v300 = vpop.f32.mrf.mxu0
    %v301 = vadd.f32 %v216, %v300
    %v302 = vpop.f32.mrf.mxu0
    %v303 = vpop.f32.mrf.mxu0
    %v304 = vpop.f32.mrf.mxu0
    %305 = vdwg.mxu0
    %v306 = vmax.f32 %v301, 0.0
    %v307 = vpack.c.bf16 %v306, %v306
    %v308 = vld [vmem:[#allocation8] sm:$0xf]
    %v309 = vld [vmem:[#allocation8 + $0x4] sm:$0xf]
    %v310 = vld [vmem:[#allocation8 + $0x8] sm:$0xf]
    %v311 = vld [vmem:[#allocation8 + $0xc] sm:$0xf]
    %v312 = vld [vmem:[#allocation8 + $0x10] sm:$0xf]
    %v313 = vld [vmem:[#allocation8 + $0x14] sm:$0xf]
    %v314 = vld [vmem:[#allocation8 + $0x18] sm:$0xf]
    %v315 = vld [vmem:[#allocation8 + $0x1c] sm:$0xf]
    %v316 = vld [vmem:[#allocation8 + $0x20] sm:$0xf]
    %v317 = vld [vmem:[#allocation8 + $0x24] sm:$0xf]
    %v318 = vld [vmem:[#allocation8 + $0x28] sm:$0xf]
    %v319 = vld [vmem:[#allocation8 + $0x2c] sm:$0xf]
    %v320 = vld [vmem:[#allocation8 + $0x30] sm:$0xf]
    %v321 = vld [vmem:[#allocation8 + $0x34] sm:$0xf]
    %v322 = vld [vmem:[#allocation8 + $0x38] sm:$0xf]
    %v323 = vld [vmem:[#allocation8 + $0x3c] sm:$0xf]
    %v324 = vld [vmem:[%s6] sm:$0x1]
    %v326 = vlaneseq
    %v327 = vshrl.u32 %v326, 7
    %v328 = vsub.s32 0, %v327
    %v329 = vrot.slane %v324, %v328
    %v347 = vunpack.c.l.b16 %v308
    %v348 = vunpack.c.l.b16 %v309
    %v349 = vunpack.c.l.b16 %v310
    %v350 = vunpack.c.l.b16 %v311
    %v351 = vunpack.c.l.b16 %v312
    %v352 = vunpack.c.l.b16 %v313
    %v353 = vunpack.c.l.b16 %v314
    %v354 = vunpack.c.l.b16 %v315
    %v355 = vunpack.c.l.b16 %v316
    %v356 = vunpack.c.l.b16 %v317
    %v357 = vunpack.c.l.b16 %v318
    %v358 = vunpack.c.l.b16 %v319
    %v359 = vunpack.c.l.b16 %v320
    %v360 = vunpack.c.l.b16 %v321
    %v361 = vunpack.c.l.b16 %v322
    %v362 = vunpack.c.l.b16 %v323
    %v363 = vpack.c.b16 %v348, %v347
    %v364 = vpack.c.b16 %v350, %v349
    %v365 = vpack.c.b16 %v352, %v351
    %v366 = vpack.c.b16 %v354, %v353
    %v367 = vpack.c.b16 %v356, %v355
    %v368 = vpack.c.b16 %v358, %v357
    %v369 = vpack.c.b16 %v360, %v359
    %v370 = vpack.c.b16 %v362, %v361
    %379 = vmatprep.subr.bf16.mxu0 0
    %380 = vmatpush1.bf16.msra.mxu0 %v370
    %381 = vmatprep.subr.bf16.mxu0 0
    %382 = vmatpush1.bf16.msra.mxu0 %v369
    %383 = vmatprep.subr.bf16.mxu0 0
    %384 = vmatpush1.bf16.msra.mxu0 %v368
    %385 = vmatprep.subr.bf16.mxu0 0
    %386 = vmatpush1.bf16.msra.mxu0 %v367
    %387 = vmatprep.subr.bf16.mxu0 0
    %388 = vmatpush1.bf16.msra.mxu0 %v366
    %389 = vmatprep.subr.bf16.mxu0 0
    %390 = vmatpush1.bf16.msra.mxu0 %v365
    %391 = vmatprep.subr.bf16.mxu0 0
    %392 = vmatpush1.bf16.msra.mxu0 %v364
    %393 = vmatprep.subr.bf16.mxu0 0
    %394 = vmatpush1.bf16.msra.mxu0 %v363
    %395 = vmatprep.subr.bf16.mxu0 0
    %396 = vmatpush2.bf16.msra.mxu0 0
    %397 = vmatprep.subr.bf16.mxu0 0
    %398 = vmatpush2.bf16.msra.mxu0 0
    %399 = vmatprep.subr.bf16.mxu0 0
    %400 = vmatpush2.bf16.msra.mxu0 0
    %401 = vmatprep.subr.bf16.mxu0 0
    %402 = vmatpush2.bf16.msra.mxu0 0
    %403 = vmatprep.subr.bf16.mxu0 0
    %404 = vmatpush2.bf16.msra.mxu0 0
    %405 = vmatprep.subr.bf16.mxu0 0
    %406 = vmatpush2.bf16.msra.mxu0 0
    %407 = vmatprep.subr.bf16.mxu0 0
    %408 = vmatpush2.bf16.msra.mxu0 0
    %409 = vmatprep.subr.bf16.mxu0 0
    %410 = vmatpush2.bf16.msra.mxu0 0
    %411 = vmatprep.mubr.bf16.mxu0 0
    %412 = vmatmul.mubr.bf16.gmra.mxu0 %v307
    %v413 = vpop.f32.mrf.mxu0
    %v414 = vadd.f32 %v329, %v413
    %v415 = vpop.f32.mrf.mxu0
    %v416 = vpop.f32.mrf.mxu0
    %v417 = vpop.f32.mrf.mxu0
    %418 = vdwg.mxu0
    %v419 = vpack.c.bf16 %v414, %v414
    %420 = vst [vmem:[#allocation10] sm:$0xf] %v419
    // Predicated region
    $region46: #{tpu_custom_call.1} parent=1 // pred_check
      _
    $region47: #{tpu_custom_call.1} parent=1 // pred_check_branch
      %422 = sbr.rel (0) target = $region49
    $region48: #{tpu_custom_call.1} parent=1 // pred_region
      %s424 = ssub.s32 64, 64
      %425 = vsyncadd [#allocation4], %s424
      %s427 = sshll.u32 [#allocation10], 4
      %s428 = int_to_ptr.vmem [resolvable:$true] %s427
      %430 = dma.vmem_to_hbm [thread:$0]  %s428, 64, %s7, [#allocation4]
    $region49: #{tpu_custom_call.1} parent=1 // pred_fallthru
      _
    // Predicated region
    $region50: #{tpu_custom_call.1} parent=1 // pred_check
      _
    $region51: #{tpu_custom_call.1} parent=1 // pred_check_branch
      %432 = sbr.rel (0) target = $region53
    $region52: #{tpu_custom_call.1} parent=1 // pred_region
      %433 = dma.done [#allocation4], 64
    $region53: #{tpu_custom_call.1} parent=1 // pred_fallthru
      _
    %434 = vsyncpa [#allocation3], 1
    %435 = vsyncpa [#allocation6], 1
    %436 = vsyncpa [#allocation9], 1
    %437 = vsyncpa [#allocation4], 1

// kernel: tpu_custom_call.1
$region0: #{tpu_custom_call.1}
  #allocation0 [shape = 'u32[]', space=smem, size = 0x4, offset = 0x4, fixed_abs, tag = 'smem constant byte address 0x4 - core index']
  #allocation1 [shape = 'u32[144,128]{1,0:T(1,128)}', space=vmem, size = 0x12000, scoped, tag = 'internal scratch']
  %s0 = inlined_call_operand.hbm [shape: bf16[8,128], index: 0, kind: input, shape index: {}]
  %s1 = inlined_call_operand.hbm [shape: bf16[128,128], index: 1, kind: input, shape index: {}]
  %s2 = inlined_call_operand.vmem [shape: f32[1,128], index: 2, kind: input, shape index: {}]
  %s3 = inlined_call_operand.hbm [shape: bf16[128,128], index: 3, kind: input, shape index: {}]
  %s4 = inlined_call_operand.vmem [shape: f32[1,128], index: 4, kind: input, shape index: {}]
  %s5 = inlined_call_operand.hbm [shape: bf16[128,128], index: 5, kind: input, shape index: {}]
  %s6 = inlined_call_operand.vmem [shape: f32[1,128], index: 6, kind: input, shape index: {}]
  %s7 = inlined_call_operand.hbm [shape: bf16[8,128], index: 7, kind: output, shape index: {}]
  %s8 = sld [smem:[#allocation0]]
  $region54: #{tpu_custom_call.1} parent=0
    _
  %s10 = ssub.s32 1, %s8
  %s11 = scalar_select 0, %s10, %s8
  $region1: #{tpu_custom_call.1} parent=0
    #allocation2 [shape = 'u8[2048]{0}', space=vmem, size = 0x800, scoped, tag = 'input window, operand 0, single buffered']
    #allocation3 [shape = 's32[1]{0}', space=sflag, size = 0x4, scoped, tag = 'scoped memory for tpu_custom_call.1']
    #allocation4 [shape = 's32[1]{0}', space=sflag, size = 0x4, scoped, tag = 'scoped memory for tpu_custom_call.1']
    #allocation5 [shape = 'u8[32768]{0}', space=vmem, size = 0x8000, scoped, tag = 'input window, operand 1, single buffered']
    #allocation6 [shape = 's32[1]{0}', space=sflag, size = 0x4, scoped, tag = 'scoped memory for tpu_custom_call.1']
    #allocation7 [shape = 'u8[32768]{0}', space=vmem, size = 0x8000, scoped, tag = 'input window, operand 3, single buffered']
    #allocation8 [shape = 'u8[32768]{0}', space=vmem, size = 0x8000, scoped, tag = 'input window, operand 5, single buffered']
    #allocation9 [shape = 's32[1]{0}', space=sflag, size = 0x4, scoped, tag = 'scoped memory for tpu_custom_call.1']
    #allocation10 [shape = 'u8[2048]{0}', space=vmem, size = 0x800, scoped, tag = 'output window, operand 0, single buffered']
    %12 = vsyncpa [#allocation3], 0
    %13 = vsyncpa [#allocation6], 0
    %14 = vsyncpa [#allocation9], 0
    %15 = vsyncpa [#allocation4], 0
    // Predicated region
    $region2: #{tpu_custom_call.1} parent=1 // pred_check
      _
    $region3: #{tpu_custom_call.1} parent=1 // pred_check_branch
      %17 = sbr.rel (0) target = $region5
    $region4: #{tpu_custom_call.1} parent=1 // pred_region
      %s19 = ssub.s32 64, 64
      %20 = vsyncadd [#allocation3], %s19
      %s22 = sshll.u32 [#allocation2], 4
      %s23 = int_to_ptr.vmem [resolvable:$true] %s22
      %25 = dma.hbm_to_vmem [thread:$0]  %s0, 64, %s23, [#allocation3]
    $region5: #{tpu_custom_call.1} parent=1 // pred_fallthru
      _
    // Predicated region
    $region6: #{tpu_custom_call.1} parent=1 // pred_check
      _
    $region7: #{tpu_custom_call.1} parent=1 // pred_check_branch
      %27 = sbr.rel (0) target = $region9
    $region8: #{tpu_custom_call.1} parent=1 // pred_region
      %s29 = ssub.s32 1024, 1024
      %30 = vsyncadd [#allocation6], %s29
      %s31 = sshll.u32 [#allocation5], 4
      %s32 = int_to_ptr.vmem [resolvable:$true] %s31
      %37 = dma.hbm_to_vmem [thread:$0]  %s1, 1024, %s32, [#allocation6], 64, 64, 4
    $region9: #{tpu_custom_call.1} parent=1 // pred_fallthru
      _
    // Predicated region
    $region10: #{tpu_custom_call.1} parent=1 // pred_check
      _
    $region11: #{tpu_custom_call.1} parent=1 // pred_check_branch
      %39 = sbr.rel (0) target = $region13
    $region12: #{tpu_custom_call.1} parent=1 // pred_region
      _
    $region13: #{tpu_custom_call.1} parent=1 // pred_fallthru
      _
    // Predicated region
    $region14: #{tpu_custom_call.1} parent=1 // pred_check
      _
    $region15: #{tpu_custom_call.1} parent=1 // pred_check_branch
      %41 = sbr.rel (0) target = $region17
    $region16: #{tpu_custom_call.1} parent=1 // pred_region
      %s43 = ssub.s32 1024, 1024
      %44 = vsyncadd [#allocation6], %s43
      %s45 = sshll.u32 [#allocation7], 4
      %s46 = int_to_ptr.vmem [resolvable:$true] %s45
      %51 = dma.hbm_to_vmem [thread:$0]  %s3, 1024, %s46, [#allocation6], 64, 64, 4
    $region17: #{tpu_custom_call.1} parent=1 // pred_fallthru
      _
    // Predicated region
    $region18: #{tpu_custom_call.1} parent=1 // pred_check
      _
    $region19: #{tpu_custom_call.1} parent=1 // pred_check_branch
      %53 = sbr.rel (0) target = $region21
    $region20: #{tpu_custom_call.1} parent=1 // pred_region
      _
    $region21: #{tpu_custom_call.1} parent=1 // pred_fallthru
      _
    // Predicated region
    $region22: #{tpu_custom_call.1} parent=1 // pred_check
      _
    $region23: #{tpu_custom_call.1} parent=1 // pred_check_branch
      %55 = sbr.rel (0) target = $region25
    $region24: #{tpu_custom_call.1} parent=1 // pred_region
      %s57 = ssub.s32 1024, 1024
      %58 = vsyncadd [#allocation9], %s57
      %s59 = sshll.u32 [#allocation8], 4
      %s60 = int_to_ptr.vmem [resolvable:$true] %s59
      %65 = dma.hbm_to_vmem [thread:$0]  %s5, 1024, %s60, [#allocation9], 64, 64, 4
    $region25: #{tpu_custom_call.1} parent=1 // pred_fallthru
      _
    // Predicated region
    $region26: #{tpu_custom_call.1} parent=1 // pred_check
      _
    $region27: #{tpu_custom_call.1} parent=1 // pred_check_branch
      %67 = sbr.rel (0) target = $region29
    $region28: #{tpu_custom_call.1} parent=1 // pred_region
      _
    $region29: #{tpu_custom_call.1} parent=1 // pred_fallthru
      _
    // Predicated region
    $region30: #{tpu_custom_call.1} parent=1 // pred_check
      _
    $region31: #{tpu_custom_call.1} parent=1 // pred_check_branch
      %69 = sbr.rel (0) target = $region33
    $region32: #{tpu_custom_call.1} parent=1 // pred_region
      %70 = dma.done [#allocation3], 64
    $region33: #{tpu_custom_call.1} parent=1 // pred_fallthru
      _
    // Predicated region
    $region34: #{tpu_custom_call.1} parent=1 // pred_check
      _
    $region35: #{tpu_custom_call.1} parent=1 // pred_check_branch
      %72 = sbr.rel (0) target = $region37
    $region36: #{tpu_custom_call.1} parent=1 // pred_region
      %73 = dma.done [#allocation6], 1024
    $region37: #{tpu_custom_call.1} parent=1 // pred_fallthru
      _
    // Predicated region
    $region38: #{tpu_custom_call.1} parent=1 // pred_check
      _
    $region39: #{tpu_custom_call.1} parent=1 // pred_check_branch
      %75 = sbr.rel (0) target = $region41
    $region40: #{tpu_custom_call.1} parent=1 // pred_region
      %76 = dma.done [#allocation6], 1024
    $region41: #{tpu_custom_call.1} parent=1 // pred_fallthru
      _
    // Predicated region
    $region42: #{tpu_custom_call.1} parent=1 // pred_check
      _
    $region43: #{tpu_custom_call.1} parent=1 // pred_check_branch
      %78 = sbr.rel (0) target = $region45
    $region44: #{tpu_custom_call.1} parent=1 // pred_region
      %79 = dma.done [#allocation9], 1024
    $region45: #{tpu_custom_call.1} parent=1 // pred_fallthru
      _
    %v81 = vld [vmem:[#allocation2] sm:$0xf]
    %v82 = vld [vmem:[#allocation5] sm:$0xf]
    %v83 = vld [vmem:[#allocation5 + $0x4] sm:$0xf]
    %v84 = vld [vmem:[#allocation5 + $0x8] sm:$0xf]
    %v85 = vld [vmem:[#allocation5 + $0xc] sm:$0xf]
    %v86 = vld [vmem:[#allocation5 + $0x10] sm:$0xf]
    %v87 = vld [vmem:[#allocation5 + $0x14] sm:$0xf]
    %v88 = vld [vmem:[#allocation5 + $0x18] sm:$0xf]
    %v89 = vld [vmem:[#allocation5 + $0x1c] sm:$0xf]
    %v90 = vld [vmem:[#allocation5 + $0x20] sm:$0xf]
    %v91 = vld [vmem:[#allocation5 + $0x24] sm:$0xf]
    %v92 = vld [vmem:[#allocation5 + $0x28] sm:$0xf]
    %v93 = vld [vmem:[#allocation5 + $0x2c] sm:$0xf]
    %v94 = vld [vmem:[#allocation5 + $0x30] sm:$0xf]
    %v95 = vld [vmem:[#allocation5 + $0x34] sm:$0xf]
    %v96 = vld [vmem:[#allocation5 + $0x38] sm:$0xf]
    %v97 = vld [vmem:[#allocation5 + $0x3c] sm:$0xf]
    %v98 = vld [vmem:[%s2] sm:$0x1]
    %v100 = vlaneseq
    %v101 = vshrl.u32 %v100, 7
    %v102 = vsub.s32 0, %v101
    %v103 = vrot.slane %v98, %v102
    %v121 = vunpack.c.l.b16 %v82
    %v122 = vunpack.c.l.b16 %v83
    %v123 = vunpack.c.l.b16 %v84
    %v124 = vunpack.c.l.b16 %v85
    %v125 = vunpack.c.l.b16 %v86
    %v126 = vunpack.c.l.b16 %v87
    %v127 = vunpack.c.l.b16 %v88
    %v128 = vunpack.c.l.b16 %v89
    %v129 = vunpack.c.l.b16 %v90
    %v130 = vunpack.c.l.b16 %v91
    %v131 = vunpack.c.l.b16 %v92
    %v132 = vunpack.c.l.b16 %v93
    %v133 = vunpack.c.l.b16 %v94
    %v134 = vunpack.c.l.b16 %v95
    %v135 = vunpack.c.l.b16 %v96
    %v136 = vunpack.c.l.b16 %v97
    %v137 = vpack.c.b16 %v122, %v121
    %v138 = vpack.c.b16 %v124, %v123
    %v139 = vpack.c.b16 %v126, %v125
    %v140 = vpack.c.b16 %v128, %v127
    %v141 = vpack.c.b16 %v130, %v129
    %v142 = vpack.c.b16 %v132, %v131
    %v143 = vpack.c.b16 %v134, %v133
    %v144 = vpack.c.b16 %v136, %v135
    %153 = vmatprep.subr.bf16.mxu0 0
    %154 = vmatpush1.bf16.msra.mxu0 %v144
    %155 = vmatprep.subr.bf16.mxu0 0
    %156 = vmatpush1.bf16.msra.mxu0 %v143
    %157 = vmatprep.subr.bf16.mxu0 0
    %158 = vmatpush1.bf16.msra.mxu0 %v142
    %159 = vmatprep.subr.bf16.mxu0 0
    %160 = vmatpush1.bf16.msra.mxu0 %v141
    %161 = vmatprep.subr.bf16.mxu0 0
    %162 = vmatpush1.bf16.msra.mxu0 %v140
    %163 = vmatprep.subr.bf16.mxu0 0
    %164 = vmatpush1.bf16.msra.mxu0 %v139
    %165 = vmatprep.subr.bf16.mxu0 0
    %166 = vmatpush1.bf16.msra.mxu0 %v138
    %167 = vmatprep.subr.bf16.mxu0 0
    %168 = vmatpush1.bf16.msra.mxu0 %v137
    %169 = vmatprep.subr.bf16.mxu0 0
    %170 = vmatpush2.bf16.msra.mxu0 0
    %171 = vmatprep.subr.bf16.mxu0 0
    %172 = vmatpush2.bf16.msra.mxu0 0
    %173 = vmatprep.subr.bf16.mxu0 0
    %174 = vmatpush2.bf16.msra.mxu0 0
    %175 = vmatprep.subr.bf16.mxu0 0
    %176 = vmatpush2.bf16.msra.mxu0 0
    %177 = vmatprep.subr.bf16.mxu0 0
    %178 = vmatpush2.bf16.msra.mxu0 0
    %179 = vmatprep.subr.bf16.mxu0 0
    %180 = vmatpush2.bf16.msra.mxu0 0
    %181 = vmatprep.subr.bf16.mxu0 0
    %182 = vmatpush2.bf16.msra.mxu0 0
    %183 = vmatprep.subr.bf16.mxu0 0
    %184 = vmatpush2.bf16.msra.mxu0 0
    %185 = vmatprep.mubr.bf16.mxu0 0
    %186 = vmatmul.mubr.bf16.gmra.mxu0 %v81
    %v187 = vpop.f32.mrf.mxu0
    %v188 = vadd.f32 %v103, %v187
    %v189 = vpop.f32.mrf.mxu0
    %v190 = vpop.f32.mrf.mxu0
    %v191 = vpop.f32.mrf.mxu0
    %192 = vdwg.mxu0
    %v193 = vmax.f32 %v188, 0.0
    %v194 = vpack.c.bf16 %v193, %v193
    %v195 = vld [vmem:[#allocation7] sm:$0xf]
    %v196 = vld [vmem:[#allocation7 + $0x4] sm:$0xf]
    %v197 = vld [vmem:[#allocation7 + $0x8] sm:$0xf]
    %v198 = vld [vmem:[#allocation7 + $0xc] sm:$0xf]
    %v199 = vld [vmem:[#allocation7 + $0x10] sm:$0xf]
    %v200 = vld [vmem:[#allocation7 + $0x14] sm:$0xf]
    %v201 = vld [vmem:[#allocation7 + $0x18] sm:$0xf]
    %v202 = vld [vmem:[#allocation7 + $0x1c] sm:$0xf]
    %v203 = vld [vmem:[#allocation7 + $0x20] sm:$0xf]
    %v204 = vld [vmem:[#allocation7 + $0x24] sm:$0xf]
    %v205 = vld [vmem:[#allocation7 + $0x28] sm:$0xf]
    %v206 = vld [vmem:[#allocation7 + $0x2c] sm:$0xf]
    %v207 = vld [vmem:[#allocation7 + $0x30] sm:$0xf]
    %v208 = vld [vmem:[#allocation7 + $0x34] sm:$0xf]
    %v209 = vld [vmem:[#allocation7 + $0x38] sm:$0xf]
    %v210 = vld [vmem:[#allocation7 + $0x3c] sm:$0xf]
    %v211 = vld [vmem:[%s4] sm:$0x1]
    %v213 = vlaneseq
    %v214 = vshrl.u32 %v213, 7
    %v215 = vsub.s32 0, %v214
    %v216 = vrot.slane %v211, %v215
    %v234 = vunpack.c.l.b16 %v195
    %v235 = vunpack.c.l.b16 %v196
    %v236 = vunpack.c.l.b16 %v197
    %v237 = vunpack.c.l.b16 %v198
    %v238 = vunpack.c.l.b16 %v199
    %v239 = vunpack.c.l.b16 %v200
    %v240 = vunpack.c.l.b16 %v201
    %v241 = vunpack.c.l.b16 %v202
    %v242 = vunpack.c.l.b16 %v203
    %v243 = vunpack.c.l.b16 %v204
    %v244 = vunpack.c.l.b16 %v205
    %v245 = vunpack.c.l.b16 %v206
    %v246 = vunpack.c.l.b16 %v207
    %v247 = vunpack.c.l.b16 %v208
    %v248 = vunpack.c.l.b16 %v209
    %v249 = vunpack.c.l.b16 %v210
    %v250 = vpack.c.b16 %v235, %v234
    %v251 = vpack.c.b16 %v237, %v236
    %v252 = vpack.c.b16 %v239, %v238
    %v253 = vpack.c.b16 %v241, %v240
    %v254 = vpack.c.b16 %v243, %v242
    %v255 = vpack.c.b16 %v245, %v244
    %v256 = vpack.c.b16 %v247, %v246
    %v257 = vpack.c.b16 %v249, %v248
    %266 = vmatprep.subr.bf16.mxu0 0
    %267 = vmatpush1.bf16.msra.mxu0 %v257
    %268 = vmatprep.subr.bf16.mxu0 0
    %269 = vmatpush1.bf16.msra.mxu0 %v256
    %270 = vmatprep.subr.bf16.mxu0 0
    %271 = vmatpush1.bf16.msra.mxu0 %v255
    %272 = vmatprep.subr.bf16.mxu0 0
    %273 = vmatpush1.bf16.msra.mxu0 %v254
    %274 = vmatprep.subr.bf16.mxu0 0
    %275 = vmatpush1.bf16.msra.mxu0 %v253
    %276 = vmatprep.subr.bf16.mxu0 0
    %277 = vmatpush1.bf16.msra.mxu0 %v252
    %278 = vmatprep.subr.bf16.mxu0 0
    %279 = vmatpush1.bf16.msra.mxu0 %v251
    %280 = vmatprep.subr.bf16.mxu0 0
    %281 = vmatpush1.bf16.msra.mxu0 %v250
    %282 = vmatprep.subr.bf16.mxu0 0
    %283 = vmatpush2.bf16.msra.mxu0 0
    %284 = vmatprep.subr.bf16.mxu0 0
    %285 = vmatpush2.bf16.msra.mxu0 0
    %286 = vmatprep.subr.bf16.mxu0 0
    %287 = vmatpush2.bf16.msra.mxu0 0
    %288 = vmatprep.subr.bf16.mxu0 0
    %289 = vmatpush2.bf16.msra.mxu0 0
    %290 = vmatprep.subr.bf16.mxu0 0
    %291 = vmatpush2.bf16.msra.mxu0 0
    %292 = vmatprep.subr.bf16.mxu0 0
    %293 = vmatpush2.bf16.msra.mxu0 0
    %294 = vmatprep.subr.bf16.mxu0 0
    %295 = vmatpush2.bf16.msra.mxu0 0
    %296 = vmatprep.subr.bf16.mxu0 0
    %297 = vmatpush2.bf16.msra.mxu0 0
    %298 = vmatprep.mubr.bf16.mxu0 0
    %299 = vmatmul.mubr.bf16.gmra.mxu0 %v194
    %v300 = vpop.f32.mrf.mxu0
    %v301 = vadd.f32 %v216, %v300
    %v302 = vpop.f32.mrf.mxu0
    %v303 = vpop.f32.mrf.mxu0
    %v304 = vpop.f32.mrf.mxu0
    %305 = vdwg.mxu0
    %v306 = vmax.f32 %v301, 0.0
    %v307 = vpack.c.bf16 %v306, %v306
    %v308 = vld [vmem:[#allocation8] sm:$0xf]
    %v309 = vld [vmem:[#allocation8 + $0x4] sm:$0xf]
    %v310 = vld [vmem:[#allocation8 + $0x8] sm:$0xf]
    %v311 = vld [vmem:[#allocation8 + $0xc] sm:$0xf]
    %v312 = vld [vmem:[#allocation8 + $0x10] sm:$0xf]
    %v313 = vld [vmem:[#allocation8 + $0x14] sm:$0xf]
    %v314 = vld [vmem:[#allocation8 + $0x18] sm:$0xf]
    %v315 = vld [vmem:[#allocation8 + $0x1c] sm:$0xf]
    %v316 = vld [vmem:[#allocation8 + $0x20] sm:$0xf]
    %v317 = vld [vmem:[#allocation8 + $0x24] sm:$0xf]
    %v318 = vld [vmem:[#allocation8 + $0x28] sm:$0xf]
    %v319 = vld [vmem:[#allocation8 + $0x2c] sm:$0xf]
    %v320 = vld [vmem:[#allocation8 + $0x30] sm:$0xf]
    %v321 = vld [vmem:[#allocation8 + $0x34] sm:$0xf]
    %v322 = vld [vmem:[#allocation8 + $0x38] sm:$0xf]
    %v323 = vld [vmem:[#allocation8 + $0x3c] sm:$0xf]
    %v324 = vld [vmem:[%s6] sm:$0x1]
    %v326 = vlaneseq
    %v327 = vshrl.u32 %v326, 7
    %v328 = vsub.s32 0, %v327
    %v329 = vrot.slane %v324, %v328
    %v347 = vunpack.c.l.b16 %v308
    %v348 = vunpack.c.l.b16 %v309
    %v349 = vunpack.c.l.b16 %v310
    %v350 = vunpack.c.l.b16 %v311
    %v351 = vunpack.c.l.b16 %v312
    %v352 = vunpack.c.l.b16 %v313
    %v353 = vunpack.c.l.b16 %v314
    %v354 = vunpack.c.l.b16 %v315
    %v355 = vunpack.c.l.b16 %v316
    %v356 = vunpack.c.l.b16 %v317
    %v357 = vunpack.c.l.b16 %v318
    %v358 = vunpack.c.l.b16 %v319
    %v359 = vunpack.c.l.b16 %v320
    %v360 = vunpack.c.l.b16 %v321
    %v361 = vunpack.c.l.b16 %v322
    %v362 = vunpack.c.l.b16 %v323
    %v363 = vpack.c.b16 %v348, %v347
    %v364 = vpack.c.b16 %v350, %v349
    %v365 = vpack.c.b16 %v352, %v351
    %v366 = vpack.c.b16 %v354, %v353
    %v367 = vpack.c.b16 %v356, %v355
    %v368 = vpack.c.b16 %v358, %v357
    %v369 = vpack.c.b16 %v360, %v359
    %v370 = vpack.c.b16 %v362, %v361
    %379 = vmatprep.subr.bf16.mxu0 0
    %380 = vmatpush1.bf16.msra.mxu0 %v370
    %381 = vmatprep.subr.bf16.mxu0 0
    %382 = vmatpush1.bf16.msra.mxu0 %v369
    %383 = vmatprep.subr.bf16.mxu0 0
    %384 = vmatpush1.bf16.msra.mxu0 %v368
    %385 = vmatprep.subr.bf16.mxu0 0
    %386 = vmatpush1.bf16.msra.mxu0 %v367
    %387 = vmatprep.subr.bf16.mxu0 0
    %388 = vmatpush1.bf16.msra.mxu0 %v366
    %389 = vmatprep.subr.bf16.mxu0 0
    %390 = vmatpush1.bf16.msra.mxu0 %v365
    %391 = vmatprep.subr.bf16.mxu0 0
    %392 = vmatpush1.bf16.msra.mxu0 %v364
    %393 = vmatprep.subr.bf16.mxu0 0
    %394 = vmatpush1.bf16.msra.mxu0 %v363
    %395 = vmatprep.subr.bf16.mxu0 0
    %396 = vmatpush2.bf16.msra.mxu0 0
    %397 = vmatprep.subr.bf16.mxu0 0
    %398 = vmatpush2.bf16.msra.mxu0 0
    %399 = vmatprep.subr.bf16.mxu0 0
    %400 = vmatpush2.bf16.msra.mxu0 0
    %401 = vmatprep.subr.bf16.mxu0 0
    %402 = vmatpush2.bf16.msra.mxu0 0
    %403 = vmatprep.subr.bf16.mxu0 0
    %404 = vmatpush2.bf16.msra.mxu0 0
    %405 = vmatprep.subr.bf16.mxu0 0
    %406 = vmatpush2.bf16.msra.mxu0 0
    %407 = vmatprep.subr.bf16.mxu0 0
    %408 = vmatpush2.bf16.msra.mxu0 0
    %409 = vmatprep.subr.bf16.mxu0 0
    %410 = vmatpush2.bf16.msra.mxu0 0
    %411 = vmatprep.mubr.bf16.mxu0 0
    %412 = vmatmul.mubr.bf16.gmra.mxu0 %v307
    %v413 = vpop.f32.mrf.mxu0
    %v414 = vadd.f32 %v329, %v413
    %v415 = vpop.f32.mrf.mxu0
    %v416 = vpop.f32.mrf.mxu0
    %v417 = vpop.f32.mrf.mxu0
    %418 = vdwg.mxu0
    %v419 = vpack.c.bf16 %v414, %v414
    %420 = vst [vmem:[#allocation10] sm:$0xf] %v419
    // Predicated region
    $region46: #{tpu_custom_call.1} parent=1 // pred_check
      _
    $region47: #{tpu_custom_call.1} parent=1 // pred_check_branch
      %422 = sbr.rel (0) target = $region49
    $region48: #{tpu_custom_call.1} parent=1 // pred_region
      %s424 = ssub.s32 64, 64
      %425 = vsyncadd [#allocation4], %s424
      %s427 = sshll.u32 [#allocation10], 4
      %s428 = int_to_ptr.vmem [resolvable:$true] %s427
      %430 = dma.vmem_to_hbm [thread:$0]  %s428, 64, %s7, [#allocation4]
    $region49: #{tpu_custom_call.1} parent=1 // pred_fallthru
      _
    // Predicated region
    $region50: #{tpu_custom_call.1} parent=1 // pred_check
      _
    $region51: #{tpu_custom_call.1} parent=1 // pred_check_branch
      %432 = sbr.rel (0) target = $region53
    $region52: #{tpu_custom_call.1} parent=1 // pred_region
      %433 = dma.done [#allocation4], 64
    $region53: #{tpu_custom_call.1} parent=1 // pred_fallthru
      _
    %434 = vsyncpa [#allocation3], 1
    %435 = vsyncpa [#allocation6], 1
    %436 = vsyncpa [#allocation9], 1
    %437 = vsyncpa [#allocation4], 1

</llo_original>
